<compile_context>
chip_gen: v5e
topology: v5e:2x2
jax: 0.10.0
libtpu: 0.0.40
codegen_flags: <defaults>
</compile_context>

<pallas_src>
import numpy as np
import jax
import jax.numpy as jnp
from jax import lax
from jax.experimental import pallas as pl
from jax.experimental.pallas import tpu as pltpu

MARGIN = 150.0
NCE_T = 0.1
# step == 0 -> initial DWA weights
CLS_W, INS_W, FEAT_W, ABS_W = 1.0, 0.01, 0.015, 0.001

# order of the stacked contrast features
IDX_EA, IDX_HA, IDX_EB, IDX_HB, IDX_EMB = 0, 1, 2, 3, 4
_FEAT_IDX = {'ea': IDX_EA, 'ha': IDX_HA, 'eb': IDX_EB, 'hb': IDX_HB,
             'emb': IDX_EMB}

_VMEM = pl.BlockSpec(memory_space=pltpu.MemorySpace.VMEM)


# --------------------------------------------------------------------------
# Kernel 1: fused prologue (BCE + separation + time-means + distance Grams)
# --------------------------------------------------------------------------

def _pick_t_tile(t):
    # whole T when small; otherwise a multiple-of-8 divisor of T so every
    # block is full (keeps VMEM bounded on v7x's 64 MiB).
    if t <= 256:
        return t
    for cand in range(256, 7, -8):
        if t % cand == 0:
            return cand
    return t


def fused_prologue(video_scores, label, feats):
    nf, b, t, c = feats.shape
    k = video_scores.shape[1]
    t_tile = _pick_t_tile(t)
    grid = (t // t_tile,)

    def kernel(scores_ref, label_ref, feats_ref,
               scal_ref, tm_ref, demb_ref, dea_ref,
               gemb_ref, gea_ref):
        ti = pl.program_id(0)
        nt = pl.num_programs(0)

        @pl.when(ti == 0)
        def _init():
            tm_ref[...] = jnp.zeros_like(tm_ref)
            gemb_ref[...] = jnp.zeros_like(gemb_ref)
            gea_ref[...] = jnp.zeros_like(gea_ref)

        x = feats_ref[...]                                 # (5, B, Tt, C)
        tm_ref[...] += jnp.sum(x, axis=2)                  # time-sum accumulate

        inv_c = 1.0 / float(c)
        mc_emb = jnp.sum(x[IDX_EMB], axis=2) * inv_c       # (B, Tt) channel means
        mc_ea = jnp.sum(x[IDX_EA], axis=2) * inv_c
        gemb_ref[...] += lax.dot_general(mc_emb, mc_emb, (((1,), (1,)), ((), ())),
                                         preferred_element_type=jnp.float32)
        gea_ref[...] += lax.dot_general(mc_ea, mc_ea, (((1,), (1,)), ((), ())),
                                        preferred_element_type=jnp.float32)

        @pl.when(ti == nt - 1)
        def _finalize():
            tmv = tm_ref[...] * (1.0 / float(t))           # time means (5,B,C)
            tm_ref[...] = tmv

            def dist_from_gram(g):
                rows = lax.broadcasted_iota(jnp.int32, (b, b), 0)
                cols = lax.broadcasted_iota(jnp.int32, (b, b), 1)
                gd = jnp.where(rows == cols, g, 0.0)
                inv_col = lax.rsqrt(jnp.sum(gd, axis=1, keepdims=True))   # (B,1)
                inv_row = lax.rsqrt(jnp.sum(gd, axis=0, keepdims=True))   # (1,B)
                return 1.0 - g * inv_col * inv_row

            demb_ref[...] = dist_from_gram(gemb_ref[...])
            dea_ref[...] = dist_from_gram(gea_ref[...])

            # separation loss: mean((relu(margin-||mean_t EA||)+||mean_t EB||)^2)
            ma = tmv[IDX_EA]
            mb = tmv[IDX_EB]
            na = jnp.sqrt(jnp.sum(ma * ma, axis=1, keepdims=True))
            nb = jnp.sqrt(jnp.sum(mb * mb, axis=1, keepdims=True))
            sq = (jnp.maximum(MARGIN - na, 0.0) + nb) ** 2                 # (B,1)
            sep = jnp.sum(sq, axis=0, keepdims=True) * (1.0 / float(b))    # (1,1)

            # BCE(video_scores, label / label.sum(1)), mean over B*K,
            # log clamped at -100 like torch.nn.BCELoss
            s = scores_ref[...]
            lab = label_ref[...]
            lab = lab / jnp.sum(lab, axis=1, keepdims=True)
            log_p = jnp.maximum(jnp.log(s), -100.0)
            log_q = jnp.maximum(jnp.log(1.0 - s), -100.0)
            bce = -(lab * log_p + (1.0 - lab) * log_q)
            cls = jnp.sum(jnp.sum(bce, axis=1, keepdims=True), axis=0,
                          keepdims=True) * (1.0 / float(b * k))            # (1,1)

            rid = lax.broadcasted_iota(jnp.int32, (2, 128), 0)
            lid = lax.broadcasted_iota(jnp.int32, (2, 128), 1)
            scal_ref[...] = (jnp.where((rid == 0) & (lid == 0), cls, 0.0) +
                             jnp.where((rid == 1) & (lid == 0), sep, 0.0))

    out_shape = (jax.ShapeDtypeStruct((2, 128), jnp.float32),    # cls / sep
                 jax.ShapeDtypeStruct((nf, b, c), jnp.float32),  # time means
                 jax.ShapeDtypeStruct((b, b), jnp.float32),      # d_emb
                 jax.ShapeDtypeStruct((b, b), jnp.float32))      # d_ea

    return pl.pallas_call(
        kernel,
        out_shape=out_shape,
        grid=grid,
        in_specs=[pl.BlockSpec((b, k), lambda ti: (0, 0)),
                  pl.BlockSpec((b, k), lambda ti: (0, 0)),
                  pl.BlockSpec((nf, b, t_tile, c), lambda ti: (0, 0, ti, 0))],
        out_specs=(pl.BlockSpec((2, 128), lambda ti: (0, 0)),
                   pl.BlockSpec((nf, b, c), lambda ti: (0, 0, 0)),
                   pl.BlockSpec((b, b), lambda ti: (0, 0)),
                   pl.BlockSpec((b, b), lambda ti: (0, 0))),
        scratch_shapes=[pltpu.VMEM((b, b), jnp.float32),   # Gram(emb channel-means)
                        pltpu.VMEM((b, b), jnp.float32)],  # Gram(EA channel-means)
        compiler_params=pltpu.CompilerParams(
            dimension_semantics=("arbitrary",),
            vmem_limit_bytes=32 * 1024 * 1024),
    )(video_scores, label, feats)


# --------------------------------------------------------------------------
# Kernel 2: batched InfoNCE over the (5B, C) time-mean bank
# --------------------------------------------------------------------------

def nce_losses(tm_flat, qoh, koh, msk, seg):
    def kernel(tm_ref, qoh_ref, koh_ref, msk_ref, seg_ref, out_ref):
        tm = tm_ref[...]                                          # (5B, C)
        # F.normalize(eps=1e-12):  x / max(||x||, eps)
        inv = lax.rsqrt(jnp.maximum(jnp.sum(tm * tm, axis=1, keepdims=True),
                                    1e-24))
        mn = tm * inv
        # gather normalized q rows (one-hot matmul, MXU) then one Gram-style
        # matmul gives every call's logits against the whole bank.
        qn = jnp.dot(qoh_ref[...], mn, preferred_element_type=jnp.float32)  # (M,C)
        logits = lax.dot_general(qn, mn, (((1,), (1,)), ((), ())),
                                 preferred_element_type=jnp.float32)
        logits = logits * (1.0 / NCE_T)                           # (M, 5B)
        l_pos = jnp.sum(logits * koh_ref[...], axis=1, keepdims=True)   # (M,1)
        l_neg = jnp.where(msk_ref[...] > 0.5, logits, -1e30)
        mx = jnp.maximum(l_pos, jnp.max(l_neg, axis=1, keepdims=True))
        se = jnp.exp(l_pos - mx) + jnp.sum(jnp.exp(l_neg - mx), axis=1,
                                           keepdims=True)
        # CE with target 0 == logsumexp(logits) - l_pos ; padding rows give 0
        loss_m = (mx + jnp.log(se)) - l_pos                       # (M, 1)

        prod = loss_m * seg_ref[...]                              # (M, 2)
        sums = jnp.sum(prod, axis=0, keepdims=True)               # (1, 2)
        rid = lax.broadcasted_iota(jnp.int32, (2, 128), 0)
        lid = lax.broadcasted_iota(jnp.int32, (2, 128), 1)
        out_ref[...] = (jnp.where((rid == 0) & (lid == 0), sums[:, 0:1], 0.0) +
                        jnp.where((rid == 1) & (lid == 0), sums[:, 1:2], 0.0))

    return pl.pallas_call(
        kernel,
        out_shape=jax.ShapeDtypeStruct((2, 128), jnp.float32),
        in_specs=[_VMEM] * 5,
        out_specs=_VMEM,
    )(tm_flat, qoh, koh, msk, seg)


# --------------------------------------------------------------------------
# host-side (data-dependent) selection — mirrors the PyTorch python loops
# --------------------------------------------------------------------------

def _class_sets(label_np):
    n, num_cls = label_np.shape
    return [[i for i in range(n) if label_np[i, c] == 1] for c in range(num_cls)]


def _build_ins_calls(label_np, dist):
    n, num_cls = label_np.shape
    csets = _class_sets(label_np)
    calls = []
    for c in range(num_cls):
        s = csets[c]
        if len(s) <= 1:
            continue
        sset = set(s)
        for idx in s:
            min_d = dist[idx].max()
            k_idx = idx                              # k initialized to q
            for j in s:                              # nearest same-class sample
                if j != idx and dist[idx, j] < min_d:
                    k_idx = j
                    min_d = dist[idx, j]
            neg = [j for j in range(n) if j != idx and j not in sset]
            calls.append((idx, k_idx, neg))
    return calls


def _build_feat_calls(label_np, dist_ea):
    n, num_cls = label_np.shape
    csets = _class_sets(label_np)
    calls = []
    for c in range(num_cls):
        s = csets[c]
        if len(s) <= 1:
            continue
        sset = set(s)
        for idx in s:
            min_d = dist_ea[idx].max()
            k_ea = ('ha', idx)
            neg = []
            for j in s:
                neg.append(('eb', j))
                neg.append(('hb', j))
                if j != idx and dist_ea[idx, j] < min_d:
                    k_ea = ('ea', j)
                    min_d = dist_ea[idx, j]
            for j in range(n):
                if j != idx and j not in sset:
                    neg += [('ea', j), ('ha', j), ('eb', j), ('hb', j)]
            calls.append((('ea', idx), k_ea, neg))          # loss_ea
            calls.append((('ha', idx), ('ea', idx), neg))   # loss_ha
    return calls


def _build_select_matrices(ins_calls, feat_calls, batch):
    nf = 5 * batch
    m = len(ins_calls) + len(feat_calls)
    m_pad = max(8, ((m + 7) // 8) * 8)
    qoh = np.zeros((m_pad, nf), np.float32)
    koh = np.zeros((m_pad, nf), np.float32)
    msk = np.zeros((m_pad, nf), np.float32)
    seg = np.zeros((m_pad, 2), np.float32)   # col0: ins / B , col1: feat / B
    inv_n = 1.0 / batch

    def flat(name, idx):
        return _FEAT_IDX[name] * batch + idx

    row = 0
    for qi, ki, neg_idx in ins_calls:
        qoh[row, flat('emb', qi)] = 1.0
        koh[row, flat('emb', ki)] = 1.0
        for j in neg_idx:
            msk[row, flat('emb', j)] = 1.0
        seg[row, 0] = inv_n
        row += 1
    for (qname, qi), (kname, ki), neg_src in feat_calls:
        qoh[row, flat(qname, qi)] = 1.0
        koh[row, flat(kname, ki)] = 1.0
        for nm, j in neg_src:
            msk[row, flat(nm, j)] = 1.0
        seg[row, 1] = inv_n
        row += 1
    return qoh, koh, msk, seg


# --------------------------------------------------------------------------
# forward
# --------------------------------------------------------------------------

def totalloss7_forward(video_scores, label, contrast_pairs):
    b, _ = video_scores.shape
    feats = jnp.stack([contrast_pairs['EA'], contrast_pairs['HA'],
                       contrast_pairs['EB'], contrast_pairs['HB'],
                       contrast_pairs['embeddings']], axis=0).astype(jnp.float32)
    c = feats.shape[-1]

    scalars, time_means, d_emb_dev, d_ea_dev = fused_prologue(
        video_scores.astype(jnp.float32), label.astype(jnp.float32), feats)

    loss_cls = scalars[0, 0]
    loss_sep = scalars[1, 0]

    # only the two small (B,B) distance matrices (and label) go to the host
    label_np = np.asarray(label)
    d_emb = np.asarray(d_emb_dev)
    d_ea = np.asarray(d_ea_dev)

    ins_calls = _build_ins_calls(label_np, d_emb)
    feat_calls = _build_feat_calls(label_np, d_ea)
    m = len(ins_calls) + len(feat_calls)

    if m > 0:
        qoh, koh, msk, seg = _build_select_matrices(ins_calls, feat_calls, b)
        tm_flat = time_means.reshape(5 * b, c)      # stays on device
        nce_out = nce_losses(tm_flat, jnp.asarray(qoh), jnp.asarray(koh),
                             jnp.asarray(msk), jnp.asarray(seg))
        loss_ins = nce_out[0, 0]
        loss_feat = nce_out[1, 0]
    else:
        loss_ins = jnp.zeros((), jnp.float32)
        loss_feat = jnp.zeros((), jnp.float32)

    # TODO(synk): DWA re-weighting (self.avg_cost buffer / self.step counter)
    # is stateful training bookkeeping; weights only change when step > 2, so
    # at step == 0 the constant initial weights used here are exact.
    loss_total = (CLS_W * loss_cls + INS_W * loss_ins
                  + FEAT_W * loss_feat + ABS_W * loss_sep)
    loss_dict = {'Loss/Action': loss_cls, 'Loss/Separation': loss_sep,
                 'Loss/Ins': loss_ins, 'Loss/Feat': loss_feat,
                 'Loss/Total': loss_total}
    return loss_total, loss_dict


# --------------------------------------------------------------------------
# main
# --------------------------------------------------------------------------

if __name__ == "__main__":
    B, NUM_CLS, T, C = 4, 4, 8, 32
    key = jax.random.PRNGKey(0)
    ks = jax.random.split(key, 6)

    video_scores = jax.nn.sigmoid(
        jax.random.normal(ks[0], (B, NUM_CLS), jnp.float32))
    # multi-hot labels: every class used for contrast has >= 2 positives and
    # every sample has out-of-class negatives available (mirrors real usage).
    label = jnp.array([[1, 0, 0, 1],
                       [1, 1, 0, 0],
                       [0, 1, 0, 0],
                       [0, 0, 1, 1]], dtype=jnp.float32)
    contrast_pairs = {
        'EA': jax.random.normal(ks[1], (B, T, C), jnp.float32),
        'EB': jax.random.normal(ks[2], (B, T, C), jnp.float32),
        'HA': jax.random.normal(ks[3], (B, T, C), jnp.float32),
        'HB': jax.random.normal(ks[4], (B, T, C), jnp.float32),
        'embeddings': jax.random.normal(ks[5], (B, T, C), jnp.float32),
    }

    loss_total, loss_dict = totalloss7_forward(video_scores, label,
                                               contrast_pairs)
    jax.block_until_ready(loss_total)
    for v in loss_dict.values():
        jax.block_until_ready(v)
    print("KERNEL_OK")
</pallas_src>

<mosaic_0001>
module attributes {stable_mosaic.version = 11 : i64} {
  func.func @kernel(%arg0: i32, %arg1: memref<4x4xf32, #tpu.memory_space<vmem>>, %arg2: memref<4x4xf32, #tpu.memory_space<vmem>>, %arg3: memref<5x4x8x32xf32, #tpu.memory_space<vmem>>, %arg4: memref<2x128xf32, #tpu.memory_space<vmem>>, %arg5: memref<5x4x32xf32, #tpu.memory_space<vmem>>, %arg6: memref<4x4xf32, #tpu.memory_space<vmem>>, %arg7: memref<4x4xf32, #tpu.memory_space<vmem>>, %arg8: memref<4x4xf32, #tpu.memory_space<vmem>>, %arg9: memref<4x4xf32, #tpu.memory_space<vmem>>) attributes {dimension_semantics = [#tpu.dimension_semantics<arbitrary>], iteration_bounds = array<i64: 1>, scalar_prefetch = 0 : i64, scratch_operands = 2 : i64, tpu.core_type = #tpu.core_type<tc>, window_params = [{pipeline_mode = #tpu.pipeline_mode<synchronous>, transform_indices = @transform_0, window_bounds = array<i64: 4, 4>}, {pipeline_mode = #tpu.pipeline_mode<synchronous>, transform_indices = @transform_1, window_bounds = array<i64: 4, 4>}, {transform_indices = @transform_2, window_bounds = array<i64: 5, 4, 8, 32>}, {pipeline_mode = #tpu.pipeline_mode<synchronous>, transform_indices = @transform_3, window_bounds = array<i64: 2, 128>}, {pipeline_mode = #tpu.pipeline_mode<synchronous>, transform_indices = @transform_4, window_bounds = array<i64: 5, 4, 32>}, {pipeline_mode = #tpu.pipeline_mode<synchronous>, transform_indices = @transform_5, window_bounds = array<i64: 4, 4>}, {pipeline_mode = #tpu.pipeline_mode<synchronous>, transform_indices = @transform_6, window_bounds = array<i64: 4, 4>}]} {
    %c0_i32 = arith.constant 0 : i32
    %0 = arith.cmpi eq, %arg0, %c0_i32 : i32
    %1 = arith.extui %0 : i1 to i32
    %c0_i32_0 = arith.constant 0 : i32
    %2 = arith.cmpi ne, %1, %c0_i32_0 : i32
    scf.if %2 {
      %cst_26 = arith.constant 0.000000e+00 : f32
      %29 = vector.broadcast %cst_26 : f32 to vector<5x4x32xf32>
      %c0_27 = arith.constant 0 : index
      %c0_28 = arith.constant 0 : index
      %c0_29 = arith.constant 0 : index
      %30 = vector.load %arg5[%c0_27, %c0_28, %c0_29] : memref<5x4x32xf32, #tpu.memory_space<vmem>>, vector<5x4x32xf32>
      tpu.vector_store %arg5[%c0_27, %c0_28, %c0_29], %29 {strides = array<i32>} : memref<5x4x32xf32, #tpu.memory_space<vmem>>, vector<5x4x32xf32>,
      %cst_30 = arith.constant 0.000000e+00 : f32
      %31 = vector.broadcast %cst_30 : f32 to vector<4x4xf32>
      %c0_31 = arith.constant 0 : index
      %c0_32 = arith.constant 0 : index
      %32 = vector.load %arg8[%c0_31, %c0_32] : memref<4x4xf32, #tpu.memory_space<vmem>>, vector<4x4xf32>
      tpu.vector_store %arg8[%c0_31, %c0_32], %31 {strides = array<i32>} : memref<4x4xf32, #tpu.memory_space<vmem>>, vector<4x4xf32>,
      %cst_33 = arith.constant 0.000000e+00 : f32
      %33 = vector.broadcast %cst_33 : f32 to vector<4x4xf32>
      %c0_34 = arith.constant 0 : index
      %c0_35 = arith.constant 0 : index
      %34 = vector.load %arg9[%c0_34, %c0_35] : memref<4x4xf32, #tpu.memory_space<vmem>>, vector<4x4xf32>
      tpu.vector_store %arg9[%c0_34, %c0_35], %33 {strides = array<i32>} : memref<4x4xf32, #tpu.memory_space<vmem>>, vector<4x4xf32>,
    } else {
    }
    %c0 = arith.constant 0 : index
    %c0_1 = arith.constant 0 : index
    %c0_2 = arith.constant 0 : index
    %c0_3 = arith.constant 0 : index
    %3 = vector.load %arg3[%c0, %c0_1, %c0_2, %c0_3] : memref<5x4x8x32xf32, #tpu.memory_space<vmem>>, vector<5x4x8x32xf32>
    %c0_4 = arith.constant 0 : index
    %c0_5 = arith.constant 0 : index
    %c0_6 = arith.constant 0 : index
    %4 = vector.load %arg5[%c0_4, %c0_5, %c0_6] : memref<5x4x32xf32, #tpu.memory_space<vmem>>, vector<5x4x32xf32>
    %cst = arith.constant dense<0.000000e+00> : vector<5x4x32xf32>
    %5 = vector.multi_reduction <add>, %3, %cst [2] : vector<5x4x8x32xf32> to vector<5x4x32xf32>
    %6 = arith.addf %4, %5 : vector<5x4x32xf32>
    %c0_7 = arith.constant 0 : index
    %c0_8 = arith.constant 0 : index
    %c0_9 = arith.constant 0 : index
    %7 = vector.load %arg5[%c0_7, %c0_8, %c0_9] : memref<5x4x32xf32, #tpu.memory_space<vmem>>, vector<5x4x32xf32>
    tpu.vector_store %arg5[%c0_7, %c0_8, %c0_9], %6 {strides = array<i32>} : memref<5x4x32xf32, #tpu.memory_space<vmem>>, vector<5x4x32xf32>,
    %8 = vector.extract_strided_slice %3 {offsets = [4, 0, 0, 0], sizes = [1, 4, 8, 32], strides = [1, 1, 1, 1]} : vector<5x4x8x32xf32> to vector<1x4x8x32xf32>
    %9 = vector.shape_cast %8 : vector<1x4x8x32xf32> to vector<4x8x32xf32>
    %cst_10 = arith.constant dense<0.000000e+00> : vector<4x8xf32>
    %10 = vector.multi_reduction <add>, %9, %cst_10 [2] : vector<4x8x32xf32> to vector<4x8xf32>
    %cst_11 = arith.constant 3.125000e-02 : f32
    %11 = vector.broadcast %cst_11 : f32 to vector<4x8xf32>
    %12 = arith.mulf %10, %11 : vector<4x8xf32>
    %13 = vector.extract_strided_slice %3 {offsets = [0, 0, 0, 0], sizes = [1, 4, 8, 32], strides = [1, 1, 1, 1]} : vector<5x4x8x32xf32> to vector<1x4x8x32xf32>
    %14 = vector.shape_cast %13 : vector<1x4x8x32xf32> to vector<4x8x32xf32>
    %cst_12 = arith.constant dense<0.000000e+00> : vector<4x8xf32>
    %15 = vector.multi_reduction <add>, %14, %cst_12 [2] : vector<4x8x32xf32> to vector<4x8xf32>
    %cst_13 = arith.constant 3.125000e-02 : f32
    %16 = vector.broadcast %cst_13 : f32 to vector<4x8xf32>
    %17 = arith.mulf %15, %16 : vector<4x8xf32>
    %c0_14 = arith.constant 0 : index
    %c0_15 = arith.constant 0 : index
    %18 = vector.load %arg8[%c0_14, %c0_15] : memref<4x4xf32, #tpu.memory_space<vmem>>, vector<4x4xf32>
    %cst_16 = arith.constant dense<0.000000e+00> : vector<4x4xf32>
    %19 = tpu.matmul %12, %12, %cst_16 {dimension_numbers = #tpu.dot_dimension_numbers<[1], [1], [0], [0], [0, 0, 1, 0], [], []>} : vector<4x8xf32>, vector<4x8xf32>, vector<4x4xf32> -> vector<4x4xf32>
    %20 = arith.addf %18, %19 : vector<4x4xf32>
    %c0_17 = arith.constant 0 : index
    %c0_18 = arith.constant 0 : index
    %21 = vector.load %arg8[%c0_17, %c0_18] : memref<4x4xf32, #tpu.memory_space<vmem>>, vector<4x4xf32>
    tpu.vector_store %arg8[%c0_17, %c0_18], %20 {strides = array<i32>} : memref<4x4xf32, #tpu.memory_space<vmem>>, vector<4x4xf32>,
    %c0_19 = arith.constant 0 : index
    %c0_20 = arith.constant 0 : index
    %22 = vector.load %arg9[%c0_19, %c0_20] : memref<4x4xf32, #tpu.memory_space<vmem>>, vector<4x4xf32>
    %cst_21 = arith.constant dense<0.000000e+00> : vector<4x4xf32>
    %23 = tpu.matmul %17, %17, %cst_21 {dimension_numbers = #tpu.dot_dimension_numbers<[1], [1], [0], [0], [0, 0, 1, 0], [], []>} : vector<4x8xf32>, vector<4x8xf32>, vector<4x4xf32> -> vector<4x4xf32>
    %24 = arith.addf %22, %23 : vector<4x4xf32>
    %c0_22 = arith.constant 0 : index
    %c0_23 = arith.constant 0 : index
    %25 = vector.load %arg9[%c0_22, %c0_23] : memref<4x4xf32, #tpu.memory_space<vmem>>, vector<4x4xf32>
    tpu.vector_store %arg9[%c0_22, %c0_23], %24 {strides = array<i32>} : memref<4x4xf32, #tpu.memory_space<vmem>>, vector<4x4xf32>,
    %c0_i32_24 = arith.constant 0 : i32
    %26 = arith.cmpi eq, %arg0, %c0_i32_24 : i32
    %27 = arith.extui %26 : i1 to i32
    %c0_i32_25 = arith.constant 0 : i32
    %28 = arith.cmpi ne, %27, %c0_i32_25 : i32
    scf.if %28 {
      %c0_26 = arith.constant 0 : index
      %c0_27 = arith.constant 0 : index
      %c0_28 = arith.constant 0 : index
      %29 = vector.load %arg5[%c0_26, %c0_27, %c0_28] : memref<5x4x32xf32, #tpu.memory_space<vmem>>, vector<5x4x32xf32>
      %cst_29 = arith.constant 1.250000e-01 : f32
      %30 = vector.broadcast %cst_29 : f32 to vector<5x4x32xf32>
      %31 = arith.mulf %29, %30 : vector<5x4x32xf32>
      %c0_30 = arith.constant 0 : index
      %c0_31 = arith.constant 0 : index
      %c0_32 = arith.constant 0 : index
      %32 = vector.load %arg5[%c0_30, %c0_31, %c0_32] : memref<5x4x32xf32, #tpu.memory_space<vmem>>, vector<5x4x32xf32>
      tpu.vector_store %arg5[%c0_30, %c0_31, %c0_32], %31 {strides = array<i32>} : memref<5x4x32xf32, #tpu.memory_space<vmem>>, vector<5x4x32xf32>,
      %c0_33 = arith.constant 0 : index
      %c0_34 = arith.constant 0 : index
      %33 = vector.load %arg8[%c0_33, %c0_34] : memref<4x4xf32, #tpu.memory_space<vmem>>, vector<4x4xf32>
      %34 = tpu.iota {dimensions = array<i32: 0>} : vector<4x4xi32>
      %35 = tpu.iota {dimensions = array<i32: 1>} : vector<4x4xi32>
      %36 = arith.cmpi eq, %34, %35 : vector<4x4xi32>
      %cst_35 = arith.constant 0.000000e+00 : f32
      %37 = vector.broadcast %cst_35 : f32 to vector<4x4xf32>
      %38 = arith.select %36, %33, %37 : vector<4x4xi1>, vector<4x4xf32>
      %cst_36 = arith.constant dense<0.000000e+00> : vector<4xf32>
      %39 = vector.multi_reduction <add>, %38, %cst_36 [1] : vector<4x4xf32> to vector<4xf32>
      %40 = vector.shape_cast %39 : vector<4xf32> to vector<4x1xf32>
      %41 = math.rsqrt %40 : vector<4x1xf32>
      %cst_37 = arith.constant dense<0.000000e+00> : vector<4xf32>
      %42 = vector.multi_reduction <add>, %38, %cst_37 [0] : vector<4x4xf32> to vector<4xf32>
      %43 = vector.shape_cast %42 : vector<4xf32> to vector<1x4xf32>
      %44 = math.rsqrt %43 : vector<1x4xf32>
      %45 = vector.broadcast %41 : vector<4x1xf32> to vector<4x4xf32>
      %46 = arith.mulf %33, %45 : vector<4x4xf32>
      %47 = vector.broadcast %44 : vector<1x4xf32> to vector<4x4xf32>
      %48 = arith.mulf %46, %47 : vector<4x4xf32>
      %cst_38 = arith.constant 1.000000e+00 : f32
      %49 = vector.broadcast %cst_38 : f32 to vector<4x4xf32>
      %50 = arith.subf %49, %48 : vector<4x4xf32>
      %c0_39 = arith.constant 0 : index
      %c0_40 = arith.constant 0 : index
      %51 = vector.load %arg6[%c0_39, %c0_40] : memref<4x4xf32, #tpu.memory_space<vmem>>, vector<4x4xf32>
      tpu.vector_store %arg6[%c0_39, %c0_40], %50 {strides = array<i32>} : memref<4x4xf32, #tpu.memory_space<vmem>>, vector<4x4xf32>,
      %c0_41 = arith.constant 0 : index
      %c0_42 = arith.constant 0 : index
      %52 = vector.load %arg9[%c0_41, %c0_42] : memref<4x4xf32, #tpu.memory_space<vmem>>, vector<4x4xf32>
      %53 = tpu.iota {dimensions = array<i32: 0>} : vector<4x4xi32>
      %54 = tpu.iota {dimensions = array<i32: 1>} : vector<4x4xi32>
      %55 = arith.cmpi eq, %53, %54 : vector<4x4xi32>
      %cst_43 = arith.constant 0.000000e+00 : f32
      %56 = vector.broadcast %cst_43 : f32 to vector<4x4xf32>
      %57 = arith.select %55, %52, %56 : vector<4x4xi1>, vector<4x4xf32>
      %cst_44 = arith.constant dense<0.000000e+00> : vector<4xf32>
      %58 = vector.multi_reduction <add>, %57, %cst_44 [1] : vector<4x4xf32> to vector<4xf32>
      %59 = vector.shape_cast %58 : vector<4xf32> to vector<4x1xf32>
      %60 = math.rsqrt %59 : vector<4x1xf32>
      %cst_45 = arith.constant dense<0.000000e+00> : vector<4xf32>
      %61 = vector.multi_reduction <add>, %57, %cst_45 [0] : vector<4x4xf32> to vector<4xf32>
      %62 = vector.shape_cast %61 : vector<4xf32> to vector<1x4xf32>
      %63 = math.rsqrt %62 : vector<1x4xf32>
      %64 = vector.broadcast %60 : vector<4x1xf32> to vector<4x4xf32>
      %65 = arith.mulf %52, %64 : vector<4x4xf32>
      %66 = vector.broadcast %63 : vector<1x4xf32> to vector<4x4xf32>
      %67 = arith.mulf %65, %66 : vector<4x4xf32>
      %cst_46 = arith.constant 1.000000e+00 : f32
      %68 = vector.broadcast %cst_46 : f32 to vector<4x4xf32>
      %69 = arith.subf %68, %67 : vector<4x4xf32>
      %c0_47 = arith.constant 0 : index
      %c0_48 = arith.constant 0 : index
      %70 = vector.load %arg7[%c0_47, %c0_48] : memref<4x4xf32, #tpu.memory_space<vmem>>, vector<4x4xf32>
      tpu.vector_store %arg7[%c0_47, %c0_48], %69 {strides = array<i32>} : memref<4x4xf32, #tpu.memory_space<vmem>>, vector<4x4xf32>,
      %71 = vector.extract_strided_slice %31 {offsets = [0, 0, 0], sizes = [1, 4, 32], strides = [1, 1, 1]} : vector<5x4x32xf32> to vector<1x4x32xf32>
      %72 = vector.shape_cast %71 : vector<1x4x32xf32> to vector<4x32xf32>
      %73 = vector.extract_strided_slice %31 {offsets = [2, 0, 0], sizes = [1, 4, 32], strides = [1, 1, 1]} : vector<5x4x32xf32> to vector<1x4x32xf32>
      %74 = vector.shape_cast %73 : vector<1x4x32xf32> to vector<4x32xf32>
      %75 = arith.mulf %72, %72 : vector<4x32xf32>
      %cst_49 = arith.constant dense<0.000000e+00> : vector<4xf32>
      %76 = vector.multi_reduction <add>, %75, %cst_49 [1] : vector<4x32xf32> to vector<4xf32>
      %77 = vector.shape_cast %76 : vector<4xf32> to vector<4x1xf32>
      %78 = math.sqrt %77 : vector<4x1xf32>
      %79 = arith.mulf %74, %74 : vector<4x32xf32>
      %cst_50 = arith.constant dense<0.000000e+00> : vector<4xf32>
      %80 = vector.multi_reduction <add>, %79, %cst_50 [1] : vector<4x32xf32> to vector<4xf32>
      %81 = vector.shape_cast %80 : vector<4xf32> to vector<4x1xf32>
      %82 = math.sqrt %81 : vector<4x1xf32>
      %cst_51 = arith.constant 1.500000e+02 : f32
      %83 = vector.broadcast %cst_51 : f32 to vector<4x1xf32>
      %84 = arith.subf %83, %78 : vector<4x1xf32>
      %cst_52 = arith.constant 0.000000e+00 : f32
      %85 = vector.broadcast %cst_52 : f32 to vector<4x1xf32>
      %86 = arith.maximumf %84, %85 : vector<4x1xf32>
      %87 = arith.addf %86, %82 : vector<4x1xf32>
      %88 = arith.mulf %87, %87 : vector<4x1xf32>
      %cst_53 = arith.constant dense<0.000000e+00> : vector<1xf32>
      %89 = vector.multi_reduction <add>, %88, %cst_53 [0] : vector<4x1xf32> to vector<1xf32>
      %90 = vector.shape_cast %89 : vector<1xf32> to vector<1x1xf32>
      %cst_54 = arith.constant 2.500000e-01 : f32
      %91 = vector.broadcast %cst_54 : f32 to vector<1x1xf32>
      %92 = arith.mulf %90, %91 : vector<1x1xf32>
      %c0_55 = arith.constant 0 : index
      %c0_56 = arith.constant 0 : index
      %93 = vector.load %arg1[%c0_55, %c0_56] : memref<4x4xf32, #tpu.memory_space<vmem>>, vector<4x4xf32>
      %c0_57 = arith.constant 0 : index
      %c0_58 = arith.constant 0 : index
      %94 = vector.load %arg2[%c0_57, %c0_58] : memref<4x4xf32, #tpu.memory_space<vmem>>, vector<4x4xf32>
      %cst_59 = arith.constant dense<0.000000e+00> : vector<4xf32>
      %95 = vector.multi_reduction <add>, %94, %cst_59 [1] : vector<4x4xf32> to vector<4xf32>
      %96 = vector.shape_cast %95 : vector<4xf32> to vector<4x1xf32>
      %97 = vector.broadcast %96 : vector<4x1xf32> to vector<4x4xf32>
      %98 = arith.divf %94, %97 : vector<4x4xf32>
      %99 = math.log %93 : vector<4x4xf32>
      %cst_60 = arith.constant -1.000000e+02 : f32
      %100 = vector.broadcast %cst_60 : f32 to vector<4x4xf32>
      %101 = arith.maximumf %99, %100 : vector<4x4xf32>
      %cst_61 = arith.constant 1.000000e+00 : f32
      %102 = vector.broadcast %cst_61 : f32 to vector<4x4xf32>
      %103 = arith.subf %102, %93 : vector<4x4xf32>
      %104 = math.log %103 : vector<4x4xf32>
      %cst_62 = arith.constant -1.000000e+02 : f32
      %105 = vector.broadcast %cst_62 : f32 to vector<4x4xf32>
      %106 = arith.maximumf %104, %105 : vector<4x4xf32>
      %107 = arith.mulf %98, %101 : vector<4x4xf32>
      %cst_63 = arith.constant 1.000000e+00 : f32
      %108 = vector.broadcast %cst_63 : f32 to vector<4x4xf32>
      %109 = arith.subf %108, %98 : vector<4x4xf32>
      %110 = arith.mulf %109, %106 : vector<4x4xf32>
      %111 = arith.addf %107, %110 : vector<4x4xf32>
      %cst_64 = arith.constant 0.000000e+00 : f32
      %112 = vector.broadcast %cst_64 : f32 to vector<4x4xf32>
      %113 = arith.subf %112, %111 : vector<4x4xf32>
      %cst_65 = arith.constant dense<0.000000e+00> : vector<4xf32>
      %114 = vector.multi_reduction <add>, %113, %cst_65 [1] : vector<4x4xf32> to vector<4xf32>
      %115 = vector.shape_cast %114 : vector<4xf32> to vector<4x1xf32>
      %cst_66 = arith.constant dense<0.000000e+00> : vector<1xf32>
      %116 = vector.multi_reduction <add>, %115, %cst_66 [0] : vector<4x1xf32> to vector<1xf32>
      %117 = vector.shape_cast %116 : vector<1xf32> to vector<1x1xf32>
      %cst_67 = arith.constant 6.250000e-02 : f32
      %118 = vector.broadcast %cst_67 : f32 to vector<1x1xf32>
      %119 = arith.mulf %117, %118 : vector<1x1xf32>
      %120 = tpu.iota {dimensions = array<i32: 0>} : vector<2x128xi32>
      %121 = tpu.iota {dimensions = array<i32: 1>} : vector<2x128xi32>
      %c0_i32_68 = arith.constant 0 : i32
      %122 = vector.broadcast %c0_i32_68 : i32 to vector<2x128xi32>
      %123 = arith.cmpi eq, %120, %122 : vector<2x128xi32>
      %c0_i32_69 = arith.constant 0 : i32
      %124 = vector.broadcast %c0_i32_69 : i32 to vector<2x128xi32>
      %125 = arith.cmpi eq, %121, %124 : vector<2x128xi32>
      %126 = arith.andi %123, %125 : vector<2x128xi1>
      %cst_70 = arith.constant 0.000000e+00 : f32
      %127 = vector.shape_cast %119 : vector<1x1xf32> to vector<1x1xf32>
      %128 = vector.broadcast %127 : vector<1x1xf32> to vector<2x128xf32>
      %129 = vector.broadcast %cst_70 : f32 to vector<2x128xf32>
      %130 = arith.select %126, %128, %129 : vector<2x128xi1>, vector<2x128xf32>
      %c1_i32 = arith.constant 1 : i32
      %131 = vector.broadcast %c1_i32 : i32 to vector<2x128xi32>
      %132 = arith.cmpi eq, %120, %131 : vector<2x128xi32>
      %c0_i32_71 = arith.constant 0 : i32
      %133 = vector.broadcast %c0_i32_71 : i32 to vector<2x128xi32>
      %134 = arith.cmpi eq, %121, %133 : vector<2x128xi32>
      %135 = arith.andi %132, %134 : vector<2x128xi1>
      %cst_72 = arith.constant 0.000000e+00 : f32
      %136 = vector.shape_cast %92 : vector<1x1xf32> to vector<1x1xf32>
      %137 = vector.broadcast %136 : vector<1x1xf32> to vector<2x128xf32>
      %138 = vector.broadcast %cst_72 : f32 to vector<2x128xf32>
      %139 = arith.select %135, %137, %138 : vector<2x128xi1>, vector<2x128xf32>
      %140 = arith.addf %130, %139 : vector<2x128xf32>
      %c0_73 = arith.constant 0 : index
      %c0_74 = arith.constant 0 : index
      %141 = vector.load %arg4[%c0_73, %c0_74] : memref<2x128xf32, #tpu.memory_space<vmem>>, vector<2x128xf32>
      tpu.vector_store %arg4[%c0_73, %c0_74], %140 {strides = array<i32>} : memref<2x128xf32, #tpu.memory_space<vmem>>, vector<2x128xf32>,
    } else {
    }
    return
  }
  func.func @transform_0(%arg0: i32) -> (i32, i32) {
    %c0_i32 = arith.constant 0 : i32
    %c0_i32_0 = arith.constant 0 : i32
    %c0_i32_1 = arith.constant 0 : i32
    return %c0_i32, %c0_i32_0 : i32, i32
  }
  func.func @transform_1(%arg0: i32) -> (i32, i32) {
    %c0_i32 = arith.constant 0 : i32
    %c0_i32_0 = arith.constant 0 : i32
    %c0_i32_1 = arith.constant 0 : i32
    return %c0_i32, %c0_i32_0 : i32, i32
  }
  func.func @transform_2(%arg0: i32) -> (i32, i32, i32, i32) {
    %c0_i32 = arith.constant 0 : i32
    %c0_i32_0 = arith.constant 0 : i32
    %c0_i32_1 = arith.constant 0 : i32
    %c0_i32_2 = arith.constant 0 : i32
    return %c0_i32, %c0_i32_0, %arg0, %c0_i32_1 : i32, i32, i32, i32
  }
  func.func @transform_3(%arg0: i32) -> (i32, i32) {
    %c0_i32 = arith.constant 0 : i32
    %c0_i32_0 = arith.constant 0 : i32
    %c0_i32_1 = arith.constant 0 : i32
    return %c0_i32, %c0_i32_0 : i32, i32
  }
  func.func @transform_4(%arg0: i32) -> (i32, i32, i32) {
    %c0_i32 = arith.constant 0 : i32
    %c0_i32_0 = arith.constant 0 : i32
    %c0_i32_1 = arith.constant 0 : i32
    %c0_i32_2 = arith.constant 0 : i32
    return %c0_i32, %c0_i32_0, %c0_i32_1 : i32, i32, i32
  }
  func.func @transform_5(%arg0: i32) -> (i32, i32) {
    %c0_i32 = arith.constant 0 : i32
    %c0_i32_0 = arith.constant 0 : i32
    %c0_i32_1 = arith.constant 0 : i32
    return %c0_i32, %c0_i32_0 : i32, i32
  }
  func.func @transform_6(%arg0: i32) -> (i32, i32) {
    %c0_i32 = arith.constant 0 : i32
    %c0_i32_0 = arith.constant 0 : i32
    %c0_i32_1 = arith.constant 0 : i32
    return %c0_i32, %c0_i32_0 : i32, i32
  }
}

</mosaic_0001>

<llo_original>
// kernel: tpu_custom_call.1
$region0: #{tpu_custom_call.1}
  #allocation0 [shape = 'u32[]', space=smem, size = 0x4, offset = 0x4, fixed_abs, tag = 'smem constant byte address 0x4 - core index']
  #allocation1 [shape = 'u32[72,128]{1,0:T(1,128)}', space=vmem, size = 0x9000, scoped, tag = 'internal scratch']
  #allocation2 [shape = 'f32[4,4]{1,0:T(4,128)}', space=vmem, size = 0x800, scoped, tag = 'scratch operand']
  #allocation3 [shape = 'f32[4,4]{1,0:T(4,128)}', space=vmem, size = 0x800, scoped, tag = 'scratch operand']
  %s0 = inlined_call_operand.hbm [shape: f32[4,4], index: 0, kind: input, shape index: {}]
  %s1 = inlined_call_operand.hbm [shape: f32[4,4], index: 1, kind: input, shape index: {}]
  %s2 = inlined_call_operand.hbm [shape: f32[5,4,8,32], index: 2, kind: input, shape index: {}]
  %s3 = inlined_call_operand.hbm [shape: f32[2,128], index: 3, kind: output, shape index: {0}]
  %s4 = inlined_call_operand.hbm [shape: f32[5,4,32], index: 4, kind: output, shape index: {1}]
  %s5 = inlined_call_operand.hbm [shape: f32[4,4], index: 5, kind: output, shape index: {2}]
  %s6 = inlined_call_operand.hbm [shape: f32[4,4], index: 6, kind: output, shape index: {3}]
  %7 = xla_tuple %s3, %s4, %s5, %s6
  %s8 = sld [smem:[#allocation0]]
  $region66: #{tpu_custom_call.1} parent=0
    _
  %s10 = ssub.s32 1, %s8
  %s11 = scalar_select 0, %s10, %s8
  $region1: #{tpu_custom_call.1} parent=0
    #allocation4 [shape = 'u8[2048]{0}', space=vmem, size = 0x800, scoped, tag = 'input window, operand 0, single buffered']
    #allocation5 [shape = 's32[1]{0}', space=sflag, size = 0x4, scoped, tag = 'scoped memory for tpu_custom_call.1']
    #allocation6 [shape = 's32[1]{0}', space=sflag, size = 0x4, scoped, tag = 'scoped memory for tpu_custom_call.1']
    #allocation7 [shape = 'u8[2048]{0}', space=vmem, size = 0x800, scoped, tag = 'input window, operand 1, single buffered']
    #allocation8 [shape = 's32[1]{0}', space=sflag, size = 0x4, scoped, tag = 'scoped memory for tpu_custom_call.1']
    #allocation9 [shape = 'u8[81920]{0}', space=vmem, size = 0x14000, scoped, tag = 'input window, operand 2, single buffered']
    #allocation10 [shape = 'u8[1024]{0}', space=vmem, size = 0x400, scoped, tag = 'output window, operand 0, single buffered']
    #allocation11 [shape = 'u8[10240]{0}', space=vmem, size = 0x2800, scoped, tag = 'output window, operand 1, single buffered']
    #allocation12 [shape = 's32[1]{0}', space=sflag, size = 0x4, scoped, tag = 'scoped memory for tpu_custom_call.1']
    #allocation13 [shape = 'u8[2048]{0}', space=vmem, size = 0x800, scoped, tag = 'output window, operand 2, single buffered']
    #allocation14 [shape = 'u8[2048]{0}', space=vmem, size = 0x800, scoped, tag = 'output window, operand 3, single buffered']
    #allocation15 [shape = 's32[1]{0}', space=sflag, size = 0x4, scoped, tag = 'scoped memory for tpu_custom_call.1']
    %12 = vsyncpa [#allocation5], 0
    %13 = vsyncpa [#allocation8], 0
    %14 = vsyncpa [#allocation6], 0
    %15 = vsyncpa [#allocation12], 0
    %16 = vsyncpa [#allocation15], 0
    // Predicated region
    $region2: #{tpu_custom_call.1} parent=1 // pred_check
      _
    $region3: #{tpu_custom_call.1} parent=1 // pred_check_branch
      %18 = sbr.rel (0) target = $region5
    $region4: #{tpu_custom_call.1} parent=1 // pred_region
      %20 = vsyncadd [#allocation5], 0
      %s22 = sshll.u32 %s0, 4
      %s23 = int_to_ptr.hbm [resolvable:$true] %s22
      %s24 = sshll.u32 [#allocation4], 4
      %s25 = int_to_ptr.vmem [resolvable:$true] %s24
      %27 = dma.hbm_to_vmem [thread:$0]  %s23, 64, %s25, [#allocation5]
    $region5: #{tpu_custom_call.1} parent=1 // pred_fallthru
      _
    // Predicated region
    $region6: #{tpu_custom_call.1} parent=1 // pred_check
      _
    $region7: #{tpu_custom_call.1} parent=1 // pred_check_branch
      %29 = sbr.rel (0) target = $region9
    $region8: #{tpu_custom_call.1} parent=1 // pred_region
      %31 = vsyncadd [#allocation8], 0
      %s33 = sshll.u32 %s1, 4
      %s34 = int_to_ptr.hbm [resolvable:$true] %s33
      %s35 = sshll.u32 [#allocation7], 4
      %s36 = int_to_ptr.vmem [resolvable:$true] %s35
      %38 = dma.hbm_to_vmem [thread:$0]  %s34, 64, %s36, [#allocation8]
    $region9: #{tpu_custom_call.1} parent=1 // pred_fallthru
      _
    // Predicated region
    $region10: #{tpu_custom_call.1} parent=1 // pred_check
      _
    $region11: #{tpu_custom_call.1} parent=1 // pred_check_branch
      %40 = sbr.rel (0) target = $region13
    $region12: #{tpu_custom_call.1} parent=1 // pred_region
      %42 = vsyncadd [#allocation8], 0
      %s43 = sshll.u32 %s2, 4
      %s44 = int_to_ptr.hbm [resolvable:$true] %s43
      %s45 = sshll.u32 [#allocation9], 4
      %s46 = int_to_ptr.vmem [resolvable:$true] %s45
      %51 = dma.hbm_to_vmem [thread:$0]  %s44, 2560, %s46, [#allocation8], 128, 128, 8
    $region13: #{tpu_custom_call.1} parent=1 // pred_fallthru
      _
    // Predicated region
    $region14: #{tpu_custom_call.1} parent=1 // pred_check
      _
    $region15: #{tpu_custom_call.1} parent=1 // pred_check_branch
      %53 = sbr.rel (0) target = $region17
    $region16: #{tpu_custom_call.1} parent=1 // pred_region
      %55 = dma.done [#allocation5], 64
    $region17: #{tpu_custom_call.1} parent=1 // pred_fallthru
      _
    // Predicated region
    $region18: #{tpu_custom_call.1} parent=1 // pred_check
      _
    $region19: #{tpu_custom_call.1} parent=1 // pred_check_branch
      %57 = sbr.rel (0) target = $region21
    $region20: #{tpu_custom_call.1} parent=1 // pred_region
      %59 = dma.done [#allocation8], 64
    $region21: #{tpu_custom_call.1} parent=1 // pred_fallthru
      _
    // Predicated region
    $region22: #{tpu_custom_call.1} parent=1 // pred_check
      _
    $region23: #{tpu_custom_call.1} parent=1 // pred_check_branch
      %61 = sbr.rel (0) target = $region25
    $region24: #{tpu_custom_call.1} parent=1 // pred_region
      %63 = dma.done [#allocation8], 2560
    $region25: #{tpu_custom_call.1} parent=1 // pred_fallthru
      _
    %p64 = scmp.eq.s32.totalorder 0, 0
    // Predicated region
    $region26: #{tpu_custom_call.1} parent=1 // pred_check
      %p65 = pneg %p64
    $region27: #{tpu_custom_call.1} parent=1 // pred_check_branch
      %67 = sbr.rel (%p65) target = $region29
    $region28: #{tpu_custom_call.1} parent=1 // pred_region
      %vm68 = vcmask 257024
      %69 = vst.msk [vmem:[#allocation11] sm:$0xf] %vm68, 0.0
      %70 = vst.msk [vmem:[#allocation11 + $0x4] sm:$0xf] %vm68, 0.0
      %71 = vst.msk [vmem:[#allocation11 + $0x8] sm:$0xf] %vm68, 0.0
      %72 = vst.msk [vmem:[#allocation11 + $0xc] sm:$0xf] %vm68, 0.0
      %73 = vst.msk [vmem:[#allocation11 + $0x10] sm:$0xf] %vm68, 0.0
      %vm74 = vcmask 27648
      %75 = vst.msk [vmem:[#allocation2] sm:$0xf] %vm74, 0.0
      %76 = vst.msk [vmem:[#allocation3] sm:$0xf] %vm74, 0.0
    $region29: #{tpu_custom_call.1} parent=1 // pred_fallthru
      _
    %v77 = vld [vmem:[#allocation9] sm:$0xff]
    %v78 = vld [vmem:[#allocation9 + $0x8] sm:$0xff]
    %v79 = vld [vmem:[#allocation9 + $0x10] sm:$0xff]
    %v80 = vld [vmem:[#allocation9 + $0x18] sm:$0xff]
    %v81 = vld [vmem:[#allocation9 + $0x20] sm:$0xff]
    %v82 = vld [vmem:[#allocation9 + $0x28] sm:$0xff]
    %v83 = vld [vmem:[#allocation9 + $0x30] sm:$0xff]
    %v84 = vld [vmem:[#allocation9 + $0x38] sm:$0xff]
    %v85 = vld [vmem:[#allocation9 + $0x40] sm:$0xff]
    %v86 = vld [vmem:[#allocation9 + $0x48] sm:$0xff]
    %v87 = vld [vmem:[#allocation9 + $0x50] sm:$0xff]
    %v88 = vld [vmem:[#allocation9 + $0x58] sm:$0xff]
    %v89 = vld [vmem:[#allocation9 + $0x60] sm:$0xff]
    %v90 = vld [vmem:[#allocation9 + $0x68] sm:$0xff]
    %v91 = vld [vmem:[#allocation9 + $0x70] sm:$0xff]
    %v92 = vld [vmem:[#allocation9 + $0x78] sm:$0xff]
    %v93 = vld [vmem:[#allocation9 + $0x80] sm:$0xff]
    %v94 = vld [vmem:[#allocation9 + $0x88] sm:$0xff]
    %v95 = vld [vmem:[#allocation9 + $0x90] sm:$0xff]
    %v96 = vld [vmem:[#allocation9 + $0x98] sm:$0xff]
    %v97 = vld [vmem:[#allocation11] sm:$0xf]
    %v98 = vld [vmem:[#allocation11 + $0x4] sm:$0xf]
    %v99 = vld [vmem:[#allocation11 + $0x8] sm:$0xf]
    %v100 = vld [vmem:[#allocation11 + $0xc] sm:$0xf]
    %v101 = vld [vmem:[#allocation11 + $0x10] sm:$0xf]
    %vm102 = vcmask 261120
    %v103 = vsel %vm102, %v77, 0.0
    %v104 = vrot.slane %v103, 4
    %v105 = vadd.f32 %v103, %v104
    %v106 = vrot.slane %v105, 2
    %v107 = vadd.f32 %v105, %v106
    %v108 = vrot.slane %v107, 1
    %v109 = vadd.f32 %v107, %v108
    %v110 = vsel %vm102, %v78, 0.0
    %v111 = vrot.slane %v110, 4
    %v112 = vadd.f32 %v110, %v111
    %v113 = vrot.slane %v112, 2
    %v114 = vadd.f32 %v112, %v113
    %v115 = vrot.slane %v114, 1
    %v116 = vadd.f32 %v114, %v115
    %v117 = vsel %vm102, %v79, 0.0
    %v118 = vrot.slane %v117, 4
    %v119 = vadd.f32 %v117, %v118
    %v120 = vrot.slane %v119, 2
    %v121 = vadd.f32 %v119, %v120
    %v122 = vrot.slane %v121, 1
    %v123 = vadd.f32 %v121, %v122
    %v124 = vsel %vm102, %v80, 0.0
    %v125 = vrot.slane %v124, 4
    %v126 = vadd.f32 %v124, %v125
    %v127 = vrot.slane %v126, 2
    %v128 = vadd.f32 %v126, %v127
    %v129 = vrot.slane %v128, 1
    %v130 = vadd.f32 %v128, %v129
    %v131 = vsel %vm102, %v81, 0.0
    %v132 = vrot.slane %v131, 4
    %v133 = vadd.f32 %v131, %v132
    %v134 = vrot.slane %v133, 2
    %v135 = vadd.f32 %v133, %v134
    %v136 = vrot.slane %v135, 1
    %v137 = vadd.f32 %v135, %v136
    %v138 = vsel %vm102, %v82, 0.0
    %v139 = vrot.slane %v138, 4
    %v140 = vadd.f32 %v138, %v139
    %v141 = vrot.slane %v140, 2
    %v142 = vadd.f32 %v140, %v141
    %v143 = vrot.slane %v142, 1
    %v144 = vadd.f32 %v142, %v143
    %v145 = vsel %vm102, %v83, 0.0
    %v146 = vrot.slane %v145, 4
    %v147 = vadd.f32 %v145, %v146
    %v148 = vrot.slane %v147, 2
    %v149 = vadd.f32 %v147, %v148
    %v150 = vrot.slane %v149, 1
    %v151 = vadd.f32 %v149, %v150
    %v152 = vsel %vm102, %v84, 0.0
    %v153 = vrot.slane %v152, 4
    %v154 = vadd.f32 %v152, %v153
    %v155 = vrot.slane %v154, 2
    %v156 = vadd.f32 %v154, %v155
    %v157 = vrot.slane %v156, 1
    %v158 = vadd.f32 %v156, %v157
    %v159 = vsel %vm102, %v85, 0.0
    %v160 = vrot.slane %v159, 4
    %v161 = vadd.f32 %v159, %v160
    %v162 = vrot.slane %v161, 2
    %v163 = vadd.f32 %v161, %v162
    %v164 = vrot.slane %v163, 1
    %v165 = vadd.f32 %v163, %v164
    %v166 = vsel %vm102, %v86, 0.0
    %v167 = vrot.slane %v166, 4
    %v168 = vadd.f32 %v166, %v167
    %v169 = vrot.slane %v168, 2
    %v170 = vadd.f32 %v168, %v169
    %v171 = vrot.slane %v170, 1
    %v172 = vadd.f32 %v170, %v171
    %v173 = vsel %vm102, %v87, 0.0
    %v174 = vrot.slane %v173, 4
    %v175 = vadd.f32 %v173, %v174
    %v176 = vrot.slane %v175, 2
    %v177 = vadd.f32 %v175, %v176
    %v178 = vrot.slane %v177, 1
    %v179 = vadd.f32 %v177, %v178
    %v180 = vsel %vm102, %v88, 0.0
    %v181 = vrot.slane %v180, 4
    %v182 = vadd.f32 %v180, %v181
    %v183 = vrot.slane %v182, 2
    %v184 = vadd.f32 %v182, %v183
    %v185 = vrot.slane %v184, 1
    %v186 = vadd.f32 %v184, %v185
    %v187 = vsel %vm102, %v89, 0.0
    %v188 = vrot.slane %v187, 4
    %v189 = vadd.f32 %v187, %v188
    %v190 = vrot.slane %v189, 2
    %v191 = vadd.f32 %v189, %v190
    %v192 = vrot.slane %v191, 1
    %v193 = vadd.f32 %v191, %v192
    %v194 = vsel %vm102, %v90, 0.0
    %v195 = vrot.slane %v194, 4
    %v196 = vadd.f32 %v194, %v195
    %v197 = vrot.slane %v196, 2
    %v198 = vadd.f32 %v196, %v197
    %v199 = vrot.slane %v198, 1
    %v200 = vadd.f32 %v198, %v199
    %v201 = vsel %vm102, %v91, 0.0
    %v202 = vrot.slane %v201, 4
    %v203 = vadd.f32 %v201, %v202
    %v204 = vrot.slane %v203, 2
    %v205 = vadd.f32 %v203, %v204
    %v206 = vrot.slane %v205, 1
    %v207 = vadd.f32 %v205, %v206
    %v208 = vsel %vm102, %v92, 0.0
    %v209 = vrot.slane %v208, 4
    %v210 = vadd.f32 %v208, %v209
    %v211 = vrot.slane %v210, 2
    %v212 = vadd.f32 %v210, %v211
    %v213 = vrot.slane %v212, 1
    %v214 = vadd.f32 %v212, %v213
    %v215 = vsel %vm102, %v93, 0.0
    %v216 = vrot.slane %v215, 4
    %v217 = vadd.f32 %v215, %v216
    %v218 = vrot.slane %v217, 2
    %v219 = vadd.f32 %v217, %v218
    %v220 = vrot.slane %v219, 1
    %v221 = vadd.f32 %v219, %v220
    %v222 = vsel %vm102, %v94, 0.0
    %v223 = vrot.slane %v222, 4
    %v224 = vadd.f32 %v222, %v223
    %v225 = vrot.slane %v224, 2
    %v226 = vadd.f32 %v224, %v225
    %v227 = vrot.slane %v226, 1
    %v228 = vadd.f32 %v226, %v227
    %v229 = vsel %vm102, %v95, 0.0
    %v230 = vrot.slane %v229, 4
    %v231 = vadd.f32 %v229, %v230
    %v232 = vrot.slane %v231, 2
    %v233 = vadd.f32 %v231, %v232
    %v234 = vrot.slane %v233, 1
    %v235 = vadd.f32 %v233, %v234
    %v236 = vsel %vm102, %v96, 0.0
    %v237 = vrot.slane %v236, 4
    %v238 = vadd.f32 %v236, %v237
    %v239 = vrot.slane %v238, 2
    %v240 = vadd.f32 %v238, %v239
    %v241 = vrot.slane %v240, 1
    %v242 = vadd.f32 %v240, %v241
    %vm263 = vcmask 1041409
    %v264 = vsel %vm263, %v116, %v109
    %vm265 = vcmask 1042434
    %v266 = vsel %vm265, %v123, %v264
    %vm267 = vcmask 1043459
    %v268 = vsel %vm267, %v130, %v266
    %v269 = vsel %vm263, %v144, %v137
    %v270 = vsel %vm265, %v151, %v269
    %v271 = vsel %vm267, %v158, %v270
    %v272 = vsel %vm263, %v172, %v165
    %v273 = vsel %vm265, %v179, %v272
    %v274 = vsel %vm267, %v186, %v273
    %v275 = vsel %vm263, %v200, %v193
    %v276 = vsel %vm265, %v207, %v275
    %v277 = vsel %vm267, %v214, %v276
    %v278 = vsel %vm263, %v228, %v221
    %v279 = vsel %vm265, %v235, %v278
    %v280 = vsel %vm267, %v242, %v279
    %v286 = vadd.f32 %v97, %v268
    %v287 = vadd.f32 %v98, %v271
    %v288 = vadd.f32 %v99, %v274
    %v289 = vadd.f32 %v100, %v277
    %v290 = vadd.f32 %v101, %v280
    %vm291 = vcmask 257024
    %292 = vst.msk [vmem:[#allocation11] sm:$0xf] %vm291, %v286
    %293 = vst.msk [vmem:[#allocation11 + $0x4] sm:$0xf] %vm291, %v287
    %294 = vst.msk [vmem:[#allocation11 + $0x8] sm:$0xf] %vm291, %v288
    %295 = vst.msk [vmem:[#allocation11 + $0xc] sm:$0xf] %vm291, %v289
    %296 = vst.msk [vmem:[#allocation11 + $0x10] sm:$0xf] %vm291, %v290
    %297 = vadd.xlane.f32.xlu0 %v215
    %v298 = vpop.xlane.xlu0 %297
    %299 = vadd.xlane.f32.xlu0 %v222
    %v300 = vpop.xlane.xlu0 %299
    %301 = vadd.xlane.f32.xlu0 %v229
    %v302 = vpop.xlane.xlu0 %301
    %303 = vadd.xlane.f32.xlu0 %v236
    %v304 = vpop.xlane.xlu0 %303
    %v305 = vmul.f32 %v298, 0.03125
    %v306 = vmul.f32 %v300, 0.03125
    %v307 = vmul.f32 %v302, 0.03125
    %v308 = vmul.f32 %v304, 0.03125
    %309 = vadd.xlane.f32.xlu0 %v103
    %v310 = vpop.xlane.xlu0 %309
    %311 = vadd.xlane.f32.xlu0 %v110
    %v312 = vpop.xlane.xlu0 %311
    %313 = vadd.xlane.f32.xlu0 %v117
    %v314 = vpop.xlane.xlu0 %313
    %315 = vadd.xlane.f32.xlu0 %v124
    %v316 = vpop.xlane.xlu0 %315
    %v317 = vmul.f32 %v310, 0.03125
    %v318 = vmul.f32 %v312, 0.03125
    %v319 = vmul.f32 %v314, 0.03125
    %v320 = vmul.f32 %v316, 0.03125
    %v321 = vld [vmem:[#allocation2] sm:$0xf]
    %v326 = vlaneseq
    %v327 = vand.u32 %v326, 127
    %v328 = vperm.slane %v305, %v327
    %v329 = vperm.slane %v306, %v327
    %v330 = vperm.slane %v307, %v327
    %v331 = vperm.slane %v308, %v327
    %v332 = vsel %vm263, %v329, %v328
    %v333 = vsel %vm265, %v330, %v332
    %v334 = vsel %vm267, %v331, %v333
    %vm335 = vcmask 64512
    %v336 = vsel %vm335, %v334, 0
    %338 = vmatpush.xpose.msra.mxu0 0.0
    %339 = vmatpush.xpose.msra.mxu0 0.0
    %340 = vmatpush.xpose.msra.mxu0 0.0
    %341 = vmatpush.xpose.msra.mxu0 0.0
    %342 = vmatpush.xpose.msra.mxu0 0.0
    %343 = vmatpush.xpose.msra.mxu0 0.0
    %344 = vmatpush.xpose.msra.mxu0 0.0
    %345 = vmatpush.xpose.msra.mxu0 0.0
    %346 = vmatpush.xpose.msra.mxu0 0.0
    %347 = vmatpush.xpose.msra.mxu0 0.0
    %348 = vmatpush.xpose.msra.mxu0 0.0
    %349 = vmatpush.xpose.msra.mxu0 0.0
    %350 = vmatpush.xpose.msra.mxu0 0.0
    %351 = vmatpush.xpose.msra.mxu0 0.0
    %352 = vmatpush.xpose.msra.mxu0 0.0
    %353 = vmatpush.xpose.msra.mxu0 %v336
    %354 = vmatmul.f32.gmra.mxu0 %v336
    %v355 = vpop.f32.mrf.mxu0
    %v356 = vadd.f32 0.0, %v355
    %357 = vdwg.mxu0
    %v358 = vadd.f32 %v321, %v356
    %vm359 = vcmask 27648
    %360 = vst.msk [vmem:[#allocation2] sm:$0xf] %vm359, %v358
    %v361 = vld [vmem:[#allocation3] sm:$0xf]
    %v366 = vperm.slane %v317, %v327
    %v367 = vperm.slane %v318, %v327
    %v368 = vperm.slane %v319, %v327
    %v369 = vperm.slane %v320, %v327
    %v370 = vsel %vm263, %v367, %v366
    %v371 = vsel %vm265, %v368, %v370
    %v372 = vsel %vm267, %v369, %v371
    %v373 = vsel %vm335, %v372, 0
    %375 = vmatpush.xpose.msra.mxu0 0.0
    %376 = vmatpush.xpose.msra.mxu0 0.0
    %377 = vmatpush.xpose.msra.mxu0 0.0
    %378 = vmatpush.xpose.msra.mxu0 0.0
    %379 = vmatpush.xpose.msra.mxu0 0.0
    %380 = vmatpush.xpose.msra.mxu0 0.0
    %381 = vmatpush.xpose.msra.mxu0 0.0
    %382 = vmatpush.xpose.msra.mxu0 0.0
    %383 = vmatpush.xpose.msra.mxu0 0.0
    %384 = vmatpush.xpose.msra.mxu0 0.0
    %385 = vmatpush.xpose.msra.mxu0 0.0
    %386 = vmatpush.xpose.msra.mxu0 0.0
    %387 = vmatpush.xpose.msra.mxu0 0.0
    %388 = vmatpush.xpose.msra.mxu0 0.0
    %389 = vmatpush.xpose.msra.mxu0 0.0
    %390 = vmatpush.xpose.msra.mxu0 %v373
    %391 = vmatmul.f32.gmra.mxu0 %v373
    %v392 = vpop.f32.mrf.mxu0
    %v393 = vadd.f32 0.0, %v392
    %394 = vdwg.mxu0
    %v395 = vadd.f32 %v361, %v393
    %396 = vst.msk [vmem:[#allocation3] sm:$0xf] %vm359, %v395
    // Predicated region
    $region30: #{tpu_custom_call.1} parent=1 // pred_check
      %p397 = pneg %p64
    $region31: #{tpu_custom_call.1} parent=1 // pred_check_branch
      %399 = sbr.rel (%p397) target = $region33
    $region32: #{tpu_custom_call.1} parent=1 // pred_region
      %v400 = vld [vmem:[#allocation11] sm:$0xf]
      %v401 = vld [vmem:[#allocation11 + $0x4] sm:$0xf]
      %v402 = vld [vmem:[#allocation11 + $0x8] sm:$0xf]
      %v403 = vld [vmem:[#allocation11 + $0xc] sm:$0xf]
      %v404 = vld [vmem:[#allocation11 + $0x10] sm:$0xf]
      %v405 = vmul.f32 %v400, 0.125
      %v406 = vmul.f32 %v401, 0.125
      %v407 = vmul.f32 %v402, 0.125
      %v408 = vmul.f32 %v403, 0.125
      %v409 = vmul.f32 %v404, 0.125
      %410 = vst.msk [vmem:[#allocation11] sm:$0xf] %vm291, %v405
      %411 = vst.msk [vmem:[#allocation11 + $0x4] sm:$0xf] %vm291, %v406
      %412 = vst.msk [vmem:[#allocation11 + $0x8] sm:$0xf] %vm291, %v407
      %413 = vst.msk [vmem:[#allocation11 + $0xc] sm:$0xf] %vm291, %v408
      %414 = vst.msk [vmem:[#allocation11 + $0x10] sm:$0xf] %vm291, %v409
      %v415 = vld [vmem:[#allocation2] sm:$0xf]
      %v416 = vlaneseq
      %v417 = vshrl.u32 %v416, 7
      %vm418 = vcmp.eq.s32.totalorder %v417, %v327
      %v419 = vsel %vm418, %v415, 0.0
      %v420 = vsel %vm359, %v419, 0.0
      %421 = vadd.xlane.f32.xlu0 %v420
      %v422 = vpop.xlane.xlu0 %421
      %v423 = vrsqrt.pop %v422
      %v424 = vmul.f32 %v423, %v422
      %v425 = vmul.f32 %v424, %v423
      %v426 = vmul.f32 0.5, %v425
      %v427 = vsub.f32 1.5, %v426
      %v428 = vmul.f32 %v423, %v427
      %vm429 = vweird.f32 %v422
      %vm430 = vweird.f32 %v423
      %vm431 = vmor %vm429, %vm430
      %v432 = vsel %vm431, %v423, %v428
      %v433 = vrot.slane %v420, 4
      %v434 = vadd.f32 %v420, %v433
      %v435 = vrot.slane %v434, 2
      %v436 = vadd.f32 %v434, %v435
      %v437 = vrot.slane %v436, 1
      %v438 = vadd.f32 %v436, %v437
      %v439 = vrsqrt.pop %v438
      %v440 = vmul.f32 %v439, %v438
      %v441 = vmul.f32 %v440, %v439
      %v442 = vmul.f32 0.5, %v441
      %v443 = vsub.f32 1.5, %v442
      %v444 = vmul.f32 %v439, %v443
      %vm445 = vweird.f32 %v438
      %vm446 = vweird.f32 %v439
      %vm447 = vmor %vm445, %vm446
      %v448 = vsel %vm447, %v439, %v444
      %v449 = vmul.f32 %v415, %v432
      %v450 = vmul.f32 %v449, %v448
      %v451 = vsub.f32 1.0, %v450
      %452 = vst.msk [vmem:[#allocation13] sm:$0xf] %vm359, %v451
      %v453 = vld [vmem:[#allocation3] sm:$0xf]
      %v454 = vsel %vm418, %v453, 0.0
      %v455 = vsel %vm359, %v454, 0.0
      %456 = vadd.xlane.f32.xlu0 %v455
      %v457 = vpop.xlane.xlu0 %456
      %v458 = vrsqrt.pop %v457
      %v459 = vmul.f32 %v458, %v457
      %v460 = vmul.f32 %v459, %v458
      %v461 = vmul.f32 0.5, %v460
      %v462 = vsub.f32 1.5, %v461
      %v463 = vmul.f32 %v458, %v462
      %vm464 = vweird.f32 %v457
      %vm465 = vweird.f32 %v458
      %vm466 = vmor %vm464, %vm465
      %v467 = vsel %vm466, %v458, %v463
      %v468 = vrot.slane %v455, 4
      %v469 = vadd.f32 %v455, %v468
      %v470 = vrot.slane %v469, 2
      %v471 = vadd.f32 %v469, %v470
      %v472 = vrot.slane %v471, 1
      %v473 = vadd.f32 %v471, %v472
      %v474 = vrsqrt.pop %v473
      %v475 = vmul.f32 %v474, %v473
      %v476 = vmul.f32 %v475, %v474
      %v477 = vmul.f32 0.5, %v476
      %v478 = vsub.f32 1.5, %v477
      %v479 = vmul.f32 %v474, %v478
      %vm480 = vweird.f32 %v473
      %vm481 = vweird.f32 %v474
      %vm482 = vmor %vm480, %vm481
      %v483 = vsel %vm482, %v474, %v479
      %v484 = vmul.f32 %v453, %v467
      %v485 = vmul.f32 %v484, %v483
      %v486 = vsub.f32 1.0, %v485
      %487 = vst.msk [vmem:[#allocation14] sm:$0xf] %vm359, %v486
      %v488 = vmul.f32 %v405, %v405
      %v489 = vsel %vm291, %v488, 0.0
      %490 = vadd.xlane.f32.xlu0 %v489
      %v491 = vpop.xlane.xlu0 %490
      %v492 = vrsqrt.pop %v491
      %v493 = vmul.f32 %v492, %v491
      %v494 = vmul.f32 %v493, %v492
      %v495 = vmul.f32 0.5, %v494
      %v496 = vsub.f32 1.5, %v495
      %v497 = vmul.f32 %v492, %v496
      %v498 = vmul.f32 %v491, %v497
      %vm499 = vcmp.eq.f32.partialorder %v491, inf
      %v500 = vsel %vm499, %v491, %v498
      %vm501 = vcmp.eq.f32.partialorder %v491, 0.0
      %v502 = vand.u32 %v491, 2147483648
      %v503 = vsel %vm501, %v502, %v500
      %v504 = vmul.f32 %v407, %v407
      %v505 = vsel %vm291, %v504, 0.0
      %506 = vadd.xlane.f32.xlu0 %v505
      %v507 = vpop.xlane.xlu0 %506
      %v508 = vrsqrt.pop %v507
      %v509 = vmul.f32 %v508, %v507
      %v510 = vmul.f32 %v509, %v508
      %v511 = vmul.f32 0.5, %v510
      %v512 = vsub.f32 1.5, %v511
      %v513 = vmul.f32 %v508, %v512
      %v514 = vmul.f32 %v507, %v513
      %vm515 = vcmp.eq.f32.partialorder %v507, inf
      %v516 = vsel %vm515, %v507, %v514
      %vm517 = vcmp.eq.f32.partialorder %v507, 0.0
      %v518 = vand.u32 %v507, 2147483648
      %v519 = vsel %vm517, %v518, %v516
      %v520 = vsub.f32 150.0, %v503
      %v521 = vmax.f32 %v520, 0.0
      %v522 = vadd.f32 %v521, %v519
      %v523 = vmul.f32 %v522, %v522
      %vm524 = vcmask 1043456
      %v525 = vsel %vm524, %v523, 0.0
      %v526 = vrot.slane %v525, 4
      %v527 = vadd.f32 %v525, %v526
      %v528 = vrot.slane %v527, 2
      %v529 = vadd.f32 %v527, %v528
      %v530 = vrot.slane %v529, 1
      %v531 = vadd.f32 %v529, %v530
      %v532 = vmul.f32 %v531, 0.25
      %v533 = vld [vmem:[#allocation4] sm:$0xf]
      %v534 = vld [vmem:[#allocation7] sm:$0xf]
      %v535 = vsel %vm359, %v534, 0.0
      %536 = vadd.xlane.f32.xlu0 %v535
      %v537 = vpop.xlane.xlu0 %536
      %v538 = vrcp.pop %v537
      %v539 = vmul.f32 %v537, %v538
      %v540 = vsub.f32 1.0, %v539
      %v541 = vmul.f32 %v538, %v540
      %v542 = vadd.f32 %v538, %v541
      %vm543 = vweird.f32 %v537
      %vm544 = vweird.f32 %v538
      %vm545 = vmor %vm543, %vm544
      %v546 = vsel %vm545, %v538, %v542
      %v547 = vand.u32 2147483647, %v537
      %vm548 = vcmp.eq.f32.partialorder %v547, 8.507059e+37
      %v549 = vand.u32 %v537, 2147483648
      %v550 = vor.u32 1.1754944e-38, %v549
      %v551 = vsel %vm548, %v550, %v546
      %v552 = vmul.f32 %v534, %v551
      %v553 = vlog2.pop %v533
      %v554 = vmul.f32 %v553, 0.6931472
      %v555 = vmax.f32 %v554, -100.0
      %v556 = vsub.f32 1.0, %v533
      %v557 = vlog2.pop %v556
      %v558 = vmul.f32 %v557, 0.6931472
      %v559 = vmax.f32 %v558, -100.0
      %v560 = vmul.f32 %v552, %v555
      %v561 = vsub.f32 1.0, %v552
      %v562 = vmul.f32 %v561, %v559
      %v563 = vadd.f32 %v560, %v562
      %v564 = vsub.f32 0.0, %v563
      %v565 = vsel %vm359, %v564, 0.0
      %566 = vadd.xlane.f32.xlu0 %v565
      %v567 = vpop.xlane.xlu0 %566
      %v568 = vsel %vm524, %v567, 0.0
      %v569 = vrot.slane %v568, 4
      %v570 = vadd.f32 %v568, %v569
      %v571 = vrot.slane %v570, 2
      %v572 = vadd.f32 %v570, %v571
      %v573 = vrot.slane %v572, 1
      %v574 = vadd.f32 %v572, %v573
      %v575 = vmul.f32 %v574, 0.0625
      %vm576 = vcmp.eq.s32.totalorder %v417, 0
      %vm577 = vcmp.eq.s32.totalorder %v327, 0
      %vm578 = vmand %vm576, %vm577
      %v579 = vsel %vm578, %v575, 0.0
      %vm580 = vcmp.eq.s32.totalorder %v417, 1
      %vm581 = vmand %vm580, %vm577
      %v582 = vsel %vm581, %v532, 0.0
      %v583 = vadd.f32 %v579, %v582
      %584 = vst [vmem:[#allocation10] sm:$0x3] %v583
    $region33: #{tpu_custom_call.1} parent=1 // pred_fallthru
      _
    // Predicated region
    $region34: #{tpu_custom_call.1} parent=1 // pred_check
      _
    $region35: #{tpu_custom_call.1} parent=1 // pred_check_branch
      %586 = sbr.rel (0) target = $region37
    $region36: #{tpu_custom_call.1} parent=1 // pred_region
      %588 = vsyncadd [#allocation6], 0
      %s590 = sshll.u32 [#allocation10], 4
      %s591 = int_to_ptr.vmem [resolvable:$true] %s590
      %s592 = sshll.u32 %s3, 4
      %s593 = int_to_ptr.hbm [resolvable:$true] %s592
      %595 = dma.vmem_to_hbm [thread:$0]  %s591, 32, %s593, [#allocation6]
    $region37: #{tpu_custom_call.1} parent=1 // pred_fallthru
      _
    // Predicated region
    $region38: #{tpu_custom_call.1} parent=1 // pred_check
      _
    $region39: #{tpu_custom_call.1} parent=1 // pred_check_branch
      %597 = sbr.rel (0) target = $region41
    $region40: #{tpu_custom_call.1} parent=1 // pred_region
      %599 = vsyncadd [#allocation12], 0
      %s600 = sshll.u32 [#allocation11], 4
      %s601 = int_to_ptr.vmem [resolvable:$true] %s600
      %s602 = sshll.u32 %s4, 4
      %s603 = int_to_ptr.hbm [resolvable:$true] %s602
      %608 = dma.vmem_to_hbm [thread:$0]  %s601, 320, %s603, [#allocation12], 64, 64, 4
    $region41: #{tpu_custom_call.1} parent=1 // pred_fallthru
      _
    // Predicated region
    $region42: #{tpu_custom_call.1} parent=1 // pred_check
      _
    $region43: #{tpu_custom_call.1} parent=1 // pred_check_branch
      %610 = sbr.rel (0) target = $region45
    $region44: #{tpu_custom_call.1} parent=1 // pred_region
      %612 = vsyncadd [#allocation12], 0
      %s614 = sshll.u32 [#allocation13], 4
      %s615 = int_to_ptr.vmem [resolvable:$true] %s614
      %s616 = sshll.u32 %s5, 4
      %s617 = int_to_ptr.hbm [resolvable:$true] %s616
      %619 = dma.vmem_to_hbm [thread:$0]  %s615, 64, %s617, [#allocation12]
    $region45: #{tpu_custom_call.1} parent=1 // pred_fallthru
      _
    // Predicated region
    $region46: #{tpu_custom_call.1} parent=1 // pred_check
      _
    $region47: #{tpu_custom_call.1} parent=1 // pred_check_branch
      %621 = sbr.rel (0) target = $region49
    $region48: #{tpu_custom_call.1} parent=1 // pred_region
      %623 = vsyncadd [#allocation15], 0
      %s625 = sshll.u32 [#allocation14], 4
      %s626 = int_to_ptr.vmem [resolvable:$true] %s625
      %s627 = sshll.u32 %s6, 4
      %s628 = int_to_ptr.hbm [resolvable:$true] %s627
      %630 = dma.vmem_to_hbm [thread:$0]  %s626, 64, %s628, [#allocation15]
    $region49: #{tpu_custom_call.1} parent=1 // pred_fallthru
      _
    // Predicated region
    $region50: #{tpu_custom_call.1} parent=1 // pred_check
      _
    $region51: #{tpu_custom_call.1} parent=1 // pred_check_branch
      %632 = sbr.rel (0) target = $region53
    $region52: #{tpu_custom_call.1} parent=1 // pred_region
      %634 = dma.done [#allocation6], 32
    $region53: #{tpu_custom_call.1} parent=1 // pred_fallthru
      _
    // Predicated region
    $region54: #{tpu_custom_call.1} parent=1 // pred_check
      _
    $region55: #{tpu_custom_call.1} parent=1 // pred_check_branch
      %636 = sbr.rel (0) target = $region57
    $region56: #{tpu_custom_call.1} parent=1 // pred_region
      %638 = dma.done [#allocation12], 320
    $region57: #{tpu_custom_call.1} parent=1 // pred_fallthru
      _
    // Predicated region
    $region58: #{tpu_custom_call.1} parent=1 // pred_check
      _
    $region59: #{tpu_custom_call.1} parent=1 // pred_check_branch
      %640 = sbr.rel (0) target = $region61
    $region60: #{tpu_custom_call.1} parent=1 // pred_region
      %642 = dma.done [#allocation12], 64
    $region61: #{tpu_custom_call.1} parent=1 // pred_fallthru
      _
    // Predicated region
    $region62: #{tpu_custom_call.1} parent=1 // pred_check
      _
    $region63: #{tpu_custom_call.1} parent=1 // pred_check_branch
      %644 = sbr.rel (0) target = $region65
    $region64: #{tpu_custom_call.1} parent=1 // pred_region
      %646 = dma.done [#allocation15], 64
    $region65: #{tpu_custom_call.1} parent=1 // pred_fallthru
      _
    %647 = vsyncpa [#allocation5], 1
    %648 = vsyncpa [#allocation8], 1
    %649 = vsyncpa [#allocation6], 1
    %650 = vsyncpa [#allocation12], 1
    %651 = vsyncpa [#allocation15], 1

</llo_original>
